<compile_context>
chip_gen: v7x
topology: tpu7x:2x2x1
jax: 0.10.0
libtpu: 0.0.40
codegen_flags: <defaults>
</compile_context>

<pallas_src>
import math
import functools

import numpy as np
import jax
import jax.numpy as jnp
from jax.experimental import pallas as pl
from jax.experimental.pallas import tpu as pltpu  # noqa: F401  (imported per convention)

# ----------------------------- problem sizes --------------------------------
L = 8          # sequence length
B = 2          # batch
E = 32         # in_dim (embed_dim)
NHEADS = 4     # num_heads
HD = E // NHEADS
FF = 16        # dim_feedforward
NEG_SLOPE = 0.01  # nn.LeakyReLU default


# ------------------------------- kernel -------------------------------------
def encoder_layer_kernel(x_ref, bias_ref, winT_ref, inb_ref, owT_ref, ob_ref,
                         w1T_ref, b1_ref, w2T_ref, b2_ref, o_ref,
                         *, nheads, head_dim):
    x = x_ref[...]                               # (LB, E), row = l*B + b
    lb, e = x.shape

    # --- fused QKV in-projection: one MXU pass (LB,E)x(E,3E) -----------------
    qkv = jnp.dot(x, winT_ref[...], preferred_element_type=jnp.float32) + inb_ref[...]

    # --- gather heads onto a leading batch axis: (H, LB, HD) -----------------
    def heads(base):
        return jnp.concatenate(
            [qkv[:, base + h * head_dim: base + (h + 1) * head_dim]
                 .reshape(1, lb, head_dim)
             for h in range(nheads)],
            axis=0)

    scale = 1.0 / math.sqrt(head_dim)
    qh = heads(0) * scale                        # (H, LB, HD)
    kh = heads(e)
    vh = heads(2 * e)

    # --- one batched contraction: all heads & batch elements at once ---------
    s = jnp.einsum("hrd,hcd->hrc", qh, kh,
                   preferred_element_type=jnp.float32)        # (H, LB, LB)
    s = s + bias_ref[...]                        # -1e30 on cross-batch pairs

    # --- softmax: batched reductions, reciprocal instead of divide -----------
    s = s - jnp.max(s, axis=-1, keepdims=True)
    p = jnp.exp(s)
    inv = pl.reciprocal(jnp.sum(p, axis=-1, keepdims=True))   # exact; approx=True
    p = p * inv                                               # would loosen 1e-4 tol

    ah = jnp.einsum("hrc,hcd->hrd", p, vh,
                    preferred_element_type=jnp.float32)       # (H, LB, HD)
    attn = jnp.concatenate([ah[h] for h in range(nheads)], axis=-1)   # (LB, E)

    # --- output projection + residual (dropout p=0 is identity) --------------
    attn_o = jnp.dot(attn, owT_ref[...], preferred_element_type=jnp.float32) + ob_ref[...]
    h_res = x + attn_o

    # --- feed-forward: fc2(LeakyReLU(fc1(h))) + residual ----------------------
    z = jnp.dot(h_res, w1T_ref[...], preferred_element_type=jnp.float32) + b1_ref[...]
    z = jnp.where(z >= 0, z, NEG_SLOPE * z)                    # LeakyReLU
    ff = jnp.dot(z, w2T_ref[...], preferred_element_type=jnp.float32) + b2_ref[...]

    o_ref[...] = h_res + ff


# ------------------------------- wrapper -------------------------------------
def transformer_encoder_layer(x_lbe, params):
    """x_lbe: (L, B, E) float32, PyTorch seq-first convention."""
    (inw, inb, ow, ob, w1, b1, w2, b2) = params
    Ls, Bs, Es = x_lbe.shape
    lb = Ls * Bs

    # free contiguous reshape (no transpose): row = l*B + b
    x2 = x_lbe.reshape(lb, Es)

    # additive attention mask: token r may attend token c iff same batch element
    ridx = np.arange(lb)
    same = (ridx[:, None] % Bs) == (ridx[None, :] % Bs)
    bias = jnp.asarray(np.where(same, 0.0, -1e30), dtype=jnp.float32)   # (lb, lb)

    kernel = functools.partial(encoder_layer_kernel, nheads=NHEADS, head_dim=HD)

    # Single kernel invocation, no grid: all operands are full-array VMEM blocks
    # (<25 KB total), weights pre-transposed so the kernel does no in-kernel .T.
    out2 = pl.pallas_call(
        kernel,
        out_shape=jax.ShapeDtypeStruct((lb, Es), jnp.float32),
    )(x2, bias, inw.T, inb, ow.T, ob, w1.T, b1, w2.T, b2)

    return out2.reshape(Ls, Bs, Es)              # free reshape back to (L, B, E)


# --------------------------- pure-JAX reference ------------------------------
def reference(x_lbe, params):
    (inw, inb, ow, ob, w1, b1, w2, b2) = params
    x = jnp.transpose(x_lbe, (1, 0, 2))            # (B, L, E)
    q = x @ inw[:E].T + inb[0, :E]
    k = x @ inw[E:2 * E].T + inb[0, E:2 * E]
    v = x @ inw[2 * E:].T + inb[0, 2 * E:]

    def split(t):  # (B, L, E) -> (B, H, L, hd)
        return t.reshape(B, L, NHEADS, HD).transpose(0, 2, 1, 3)

    qh, kh, vh = split(q) / math.sqrt(HD), split(k), split(v)
    s = jnp.einsum("bhqd,bhkd->bhqk", qh, kh)
    p = jax.nn.softmax(s, axis=-1)
    a = jnp.einsum("bhqk,bhkd->bhqd", p, vh).transpose(0, 2, 1, 3).reshape(B, L, E)
    a = a @ ow.T + ob[0]
    h = x + a
    z = h @ w1.T + b1[0]
    z = jnp.where(z >= 0, z, NEG_SLOPE * z)
    out = h + (z @ w2.T + b2[0])
    return jnp.transpose(out, (1, 0, 2))


# --------------------------------- main --------------------------------------
if __name__ == "__main__":
    key = jax.random.PRNGKey(0)
    keys = jax.random.split(key, 10)

    # Deterministic synthetic parameters (shapes mirror the PyTorch module).
    inw = 0.1 * jax.random.normal(keys[0], (3 * E, E), jnp.float32)   # in_proj_weight
    inb = 0.1 * jax.random.normal(keys[1], (1, 3 * E), jnp.float32)   # in_proj_bias
    ow = 0.1 * jax.random.normal(keys[2], (E, E), jnp.float32)        # out_proj.weight
    ob = 0.1 * jax.random.normal(keys[3], (1, E), jnp.float32)        # out_proj.bias
    w1 = 0.1 * jax.random.normal(keys[4], (FF, E), jnp.float32)       # fc1.weight
    b1 = 0.1 * jax.random.normal(keys[5], (1, FF), jnp.float32)       # fc1.bias
    w2 = 0.1 * jax.random.normal(keys[6], (E, FF), jnp.float32)       # fc2.weight
    b2 = 0.1 * jax.random.normal(keys[7], (1, E), jnp.float32)        # fc2.bias
    params = (inw, inb, ow, ob, w1, b1, w2, b2)

    x = jax.random.normal(keys[8], (L, B, E), jnp.float32)            # (seq, batch, embed)

    out = transformer_encoder_layer(x, params)
    out = jax.block_until_ready(out)

    ref = reference(x, params)
    assert out.shape == (L, B, E)
    assert jnp.allclose(out, ref, atol=1e-4, rtol=1e-4), "mismatch vs reference"

    print("KERNEL_OK")
</pallas_src>

<mosaic_0001>
module attributes {stable_mosaic.version = 11 : i64} {
  func.func @encoder_layer_kernel(%arg0: memref<16x32xf32, #tpu.memory_space<vmem>>, %arg1: memref<16x16xf32, #tpu.memory_space<vmem>>, %arg2: memref<32x96xf32, #tpu.memory_space<vmem>>, %arg3: memref<1x96xf32, #tpu.memory_space<vmem>>, %arg4: memref<32x32xf32, #tpu.memory_space<vmem>>, %arg5: memref<1x32xf32, #tpu.memory_space<vmem>>, %arg6: memref<32x16xf32, #tpu.memory_space<vmem>>, %arg7: memref<1x16xf32, #tpu.memory_space<vmem>>, %arg8: memref<16x32xf32, #tpu.memory_space<vmem>>, %arg9: memref<1x32xf32, #tpu.memory_space<vmem>>, %arg10: memref<16x32xf32, #tpu.memory_space<vmem>>) attributes {dimension_semantics = [], scalar_prefetch = 0 : i64, scratch_operands = 0 : i64, tpu.core_type = #tpu.core_type<tc>} {
    %c0 = arith.constant 0 : index
    %c0_0 = arith.constant 0 : index
    %0 = vector.load %arg0[%c0, %c0_0] : memref<16x32xf32, #tpu.memory_space<vmem>>, vector<16x32xf32>
    %c0_1 = arith.constant 0 : index
    %c0_2 = arith.constant 0 : index
    %1 = vector.load %arg2[%c0_1, %c0_2] : memref<32x96xf32, #tpu.memory_space<vmem>>, vector<32x96xf32>
    %cst = arith.constant dense<0.000000e+00> : vector<16x96xf32>
    %2 = tpu.matmul %0, %1, %cst {dimension_numbers = #tpu.dot_dimension_numbers<[1], [0], [0], [1], [0, 0, 1, 1], [], []>} : vector<16x32xf32>, vector<32x96xf32>, vector<16x96xf32> -> vector<16x96xf32>
    %c0_3 = arith.constant 0 : index
    %c0_4 = arith.constant 0 : index
    %3 = vector.load %arg3[%c0_3, %c0_4] : memref<1x96xf32, #tpu.memory_space<vmem>>, vector<1x96xf32>
    %4 = vector.broadcast %3 : vector<1x96xf32> to vector<16x96xf32>
    %5 = arith.addf %2, %4 : vector<16x96xf32>
    %6 = vector.extract_strided_slice %5 {offsets = [0, 0], sizes = [16, 8], strides = [1, 1]} : vector<16x96xf32> to vector<16x8xf32>
    %7 = vector.shape_cast %6 : vector<16x8xf32> to vector<1x16x8xf32>
    %8 = vector.extract_strided_slice %5 {offsets = [0, 8], sizes = [16, 8], strides = [1, 1]} : vector<16x96xf32> to vector<16x8xf32>
    %9 = vector.shape_cast %8 : vector<16x8xf32> to vector<1x16x8xf32>
    %10 = vector.extract_strided_slice %5 {offsets = [0, 16], sizes = [16, 8], strides = [1, 1]} : vector<16x96xf32> to vector<16x8xf32>
    %11 = vector.shape_cast %10 : vector<16x8xf32> to vector<1x16x8xf32>
    %12 = vector.extract_strided_slice %5 {offsets = [0, 24], sizes = [16, 8], strides = [1, 1]} : vector<16x96xf32> to vector<16x8xf32>
    %13 = vector.shape_cast %12 : vector<16x8xf32> to vector<1x16x8xf32>
    %14 = tpu.concatenate %7, %9, %11, %13 in 0 : vector<1x16x8xf32>, vector<1x16x8xf32>, vector<1x16x8xf32>, vector<1x16x8xf32> -> vector<4x16x8xf32>
    %cst_5 = arith.constant 0.353553385 : f32
    %15 = vector.broadcast %cst_5 : f32 to vector<4x16x8xf32>
    %16 = arith.mulf %14, %15 : vector<4x16x8xf32>
    %17 = vector.extract_strided_slice %5 {offsets = [0, 32], sizes = [16, 8], strides = [1, 1]} : vector<16x96xf32> to vector<16x8xf32>
    %18 = vector.shape_cast %17 : vector<16x8xf32> to vector<1x16x8xf32>
    %19 = vector.extract_strided_slice %5 {offsets = [0, 40], sizes = [16, 8], strides = [1, 1]} : vector<16x96xf32> to vector<16x8xf32>
    %20 = vector.shape_cast %19 : vector<16x8xf32> to vector<1x16x8xf32>
    %21 = vector.extract_strided_slice %5 {offsets = [0, 48], sizes = [16, 8], strides = [1, 1]} : vector<16x96xf32> to vector<16x8xf32>
    %22 = vector.shape_cast %21 : vector<16x8xf32> to vector<1x16x8xf32>
    %23 = vector.extract_strided_slice %5 {offsets = [0, 56], sizes = [16, 8], strides = [1, 1]} : vector<16x96xf32> to vector<16x8xf32>
    %24 = vector.shape_cast %23 : vector<16x8xf32> to vector<1x16x8xf32>
    %25 = tpu.concatenate %18, %20, %22, %24 in 0 : vector<1x16x8xf32>, vector<1x16x8xf32>, vector<1x16x8xf32>, vector<1x16x8xf32> -> vector<4x16x8xf32>
    %26 = vector.extract_strided_slice %5 {offsets = [0, 64], sizes = [16, 8], strides = [1, 1]} : vector<16x96xf32> to vector<16x8xf32>
    %27 = vector.shape_cast %26 : vector<16x8xf32> to vector<1x16x8xf32>
    %28 = vector.extract_strided_slice %5 {offsets = [0, 72], sizes = [16, 8], strides = [1, 1]} : vector<16x96xf32> to vector<16x8xf32>
    %29 = vector.shape_cast %28 : vector<16x8xf32> to vector<1x16x8xf32>
    %30 = vector.extract_strided_slice %5 {offsets = [0, 80], sizes = [16, 8], strides = [1, 1]} : vector<16x96xf32> to vector<16x8xf32>
    %31 = vector.shape_cast %30 : vector<16x8xf32> to vector<1x16x8xf32>
    %32 = vector.extract_strided_slice %5 {offsets = [0, 88], sizes = [16, 8], strides = [1, 1]} : vector<16x96xf32> to vector<16x8xf32>
    %33 = vector.shape_cast %32 : vector<16x8xf32> to vector<1x16x8xf32>
    %34 = tpu.concatenate %27, %29, %31, %33 in 0 : vector<1x16x8xf32>, vector<1x16x8xf32>, vector<1x16x8xf32>, vector<1x16x8xf32> -> vector<4x16x8xf32>
    "tpu.trace_start"() <{level = 10 : i32, message = "hrd,hcd->hrc"}> : () -> ()
    %cst_6 = arith.constant dense<0.000000e+00> : vector<4x16x16xf32>
    %35 = tpu.matmul %16, %25, %cst_6 {dimension_numbers = #tpu.dot_dimension_numbers<[2], [2], [1], [1], [0, 0, 0, 1, 1, 1], [0], [0]>} : vector<4x16x8xf32>, vector<4x16x8xf32>, vector<4x16x16xf32> -> vector<4x16x16xf32>
    "tpu.trace_stop"() : () -> ()
    %c0_7 = arith.constant 0 : index
    %c0_8 = arith.constant 0 : index
    %36 = vector.load %arg1[%c0_7, %c0_8] : memref<16x16xf32, #tpu.memory_space<vmem>>, vector<16x16xf32>
    %37 = vector.shape_cast %36 : vector<16x16xf32> to vector<1x16x16xf32>
    %38 = vector.broadcast %37 : vector<1x16x16xf32> to vector<4x16x16xf32>
    %39 = arith.addf %35, %38 : vector<4x16x16xf32>
    %cst_9 = arith.constant dense<0xFF800000> : vector<4x16xf32>
    %40 = vector.multi_reduction <maximumf>, %39, %cst_9 [2] : vector<4x16x16xf32> to vector<4x16xf32>
    %41 = vector.shape_cast %40 : vector<4x16xf32> to vector<4x16x1xf32>
    %42 = vector.broadcast %41 : vector<4x16x1xf32> to vector<4x16x16xf32>
    %43 = arith.subf %39, %42 : vector<4x16x16xf32>
    %44 = math.exp %43 : vector<4x16x16xf32>
    %cst_10 = arith.constant dense<0.000000e+00> : vector<4x16xf32>
    %45 = vector.multi_reduction <add>, %44, %cst_10 [2] : vector<4x16x16xf32> to vector<4x16xf32>
    %46 = vector.shape_cast %45 : vector<4x16xf32> to vector<4x16x1xf32>
    %47 = tpu.reciprocal %46 : vector<4x16x1xf32> -> vector<4x16x1xf32>
    %48 = vector.broadcast %47 : vector<4x16x1xf32> to vector<4x16x16xf32>
    %49 = arith.mulf %44, %48 : vector<4x16x16xf32>
    "tpu.trace_start"() <{level = 10 : i32, message = "hrc,hcd->hrd"}> : () -> ()
    %cst_11 = arith.constant dense<0.000000e+00> : vector<4x16x8xf32>
    %50 = tpu.matmul %49, %34, %cst_11 {dimension_numbers = #tpu.dot_dimension_numbers<[2], [1], [1], [2], [0, 0, 0, 1, 1, 2], [0], [0]>} : vector<4x16x16xf32>, vector<4x16x8xf32>, vector<4x16x8xf32> -> vector<4x16x8xf32>
    "tpu.trace_stop"() : () -> ()
    %51 = vector.extract_strided_slice %50 {offsets = [0, 0, 0], sizes = [1, 16, 8], strides = [1, 1, 1]} : vector<4x16x8xf32> to vector<1x16x8xf32>
    %52 = vector.shape_cast %51 : vector<1x16x8xf32> to vector<16x8xf32>
    %53 = vector.extract_strided_slice %50 {offsets = [1, 0, 0], sizes = [1, 16, 8], strides = [1, 1, 1]} : vector<4x16x8xf32> to vector<1x16x8xf32>
    %54 = vector.shape_cast %53 : vector<1x16x8xf32> to vector<16x8xf32>
    %55 = vector.extract_strided_slice %50 {offsets = [2, 0, 0], sizes = [1, 16, 8], strides = [1, 1, 1]} : vector<4x16x8xf32> to vector<1x16x8xf32>
    %56 = vector.shape_cast %55 : vector<1x16x8xf32> to vector<16x8xf32>
    %57 = vector.extract_strided_slice %50 {offsets = [3, 0, 0], sizes = [1, 16, 8], strides = [1, 1, 1]} : vector<4x16x8xf32> to vector<1x16x8xf32>
    %58 = vector.shape_cast %57 : vector<1x16x8xf32> to vector<16x8xf32>
    %59 = tpu.concatenate %52, %54, %56, %58 in 1 : vector<16x8xf32>, vector<16x8xf32>, vector<16x8xf32>, vector<16x8xf32> -> vector<16x32xf32>
    %c0_12 = arith.constant 0 : index
    %c0_13 = arith.constant 0 : index
    %60 = vector.load %arg4[%c0_12, %c0_13] : memref<32x32xf32, #tpu.memory_space<vmem>>, vector<32x32xf32>
    %cst_14 = arith.constant dense<0.000000e+00> : vector<16x32xf32>
    %61 = tpu.matmul %59, %60, %cst_14 {dimension_numbers = #tpu.dot_dimension_numbers<[1], [0], [0], [1], [0, 0, 1, 1], [], []>} : vector<16x32xf32>, vector<32x32xf32>, vector<16x32xf32> -> vector<16x32xf32>
    %c0_15 = arith.constant 0 : index
    %c0_16 = arith.constant 0 : index
    %62 = vector.load %arg5[%c0_15, %c0_16] : memref<1x32xf32, #tpu.memory_space<vmem>>, vector<1x32xf32>
    %63 = vector.broadcast %62 : vector<1x32xf32> to vector<16x32xf32>
    %64 = arith.addf %61, %63 : vector<16x32xf32>
    %65 = arith.addf %0, %64 : vector<16x32xf32>
    %c0_17 = arith.constant 0 : index
    %c0_18 = arith.constant 0 : index
    %66 = vector.load %arg6[%c0_17, %c0_18] : memref<32x16xf32, #tpu.memory_space<vmem>>, vector<32x16xf32>
    %cst_19 = arith.constant dense<0.000000e+00> : vector<16x16xf32>
    %67 = tpu.matmul %65, %66, %cst_19 {dimension_numbers = #tpu.dot_dimension_numbers<[1], [0], [0], [1], [0, 0, 1, 1], [], []>} : vector<16x32xf32>, vector<32x16xf32>, vector<16x16xf32> -> vector<16x16xf32>
    %c0_20 = arith.constant 0 : index
    %c0_21 = arith.constant 0 : index
    %68 = vector.load %arg7[%c0_20, %c0_21] : memref<1x16xf32, #tpu.memory_space<vmem>>, vector<1x16xf32>
    %69 = vector.broadcast %68 : vector<1x16xf32> to vector<16x16xf32>
    %70 = arith.addf %67, %69 : vector<16x16xf32>
    %cst_22 = arith.constant 0.000000e+00 : f32
    %71 = vector.broadcast %cst_22 : f32 to vector<16x16xf32>
    %72 = arith.cmpf oge, %70, %71 : vector<16x16xf32>
    %cst_23 = arith.constant 0.00999999977 : f32
    %73 = vector.broadcast %cst_23 : f32 to vector<16x16xf32>
    %74 = arith.mulf %73, %70 : vector<16x16xf32>
    %75 = arith.select %72, %70, %74 : vector<16x16xi1>, vector<16x16xf32>
    %c0_24 = arith.constant 0 : index
    %c0_25 = arith.constant 0 : index
    %76 = vector.load %arg8[%c0_24, %c0_25] : memref<16x32xf32, #tpu.memory_space<vmem>>, vector<16x32xf32>
    %cst_26 = arith.constant dense<0.000000e+00> : vector<16x32xf32>
    %77 = tpu.matmul %75, %76, %cst_26 {dimension_numbers = #tpu.dot_dimension_numbers<[1], [0], [0], [1], [0, 0, 1, 1], [], []>} : vector<16x16xf32>, vector<16x32xf32>, vector<16x32xf32> -> vector<16x32xf32>
    %c0_27 = arith.constant 0 : index
    %c0_28 = arith.constant 0 : index
    %78 = vector.load %arg9[%c0_27, %c0_28] : memref<1x32xf32, #tpu.memory_space<vmem>>, vector<1x32xf32>
    %79 = vector.broadcast %78 : vector<1x32xf32> to vector<16x32xf32>
    %80 = arith.addf %77, %79 : vector<16x32xf32>
    %81 = arith.addf %65, %80 : vector<16x32xf32>
    %c0_29 = arith.constant 0 : index
    %c0_30 = arith.constant 0 : index
    %82 = vector.load %arg10[%c0_29, %c0_30] : memref<16x32xf32, #tpu.memory_space<vmem>>, vector<16x32xf32>
    tpu.vector_store %arg10[%c0_29, %c0_30], %81 {strides = array<i32>} : memref<16x32xf32, #tpu.memory_space<vmem>>, vector<16x32xf32>,
    return
  }
}

</mosaic_0001>

<llo_original>
// kernel: tpu_custom_call.1
$region0: #{tpu_custom_call.1}
  #allocation0 [shape = 'u32[]', space=smem, size = 0x4, offset = 0x4, fixed_abs, tag = 'smem constant byte address 0x4 - core index']
  #allocation1 [shape = 'u32[144,128]{1,0:T(1,128)}', space=vmem, size = 0x12000, scoped, tag = 'internal scratch']
  %s0 = inlined_call_operand.vmem [shape: f32[16,32], index: 0, kind: input, shape index: {}]
  %s1 = inlined_call_operand.hbm [shape: f32[16,16], index: 1, kind: input, shape index: {}]
  %s2 = inlined_call_operand.vmem [shape: f32[32,96], index: 2, kind: input, shape index: {}]
  %s3 = inlined_call_operand.vmem [shape: f32[1,96], index: 3, kind: input, shape index: {}]
  %s4 = inlined_call_operand.hbm [shape: f32[32,32], index: 4, kind: input, shape index: {}]
  %s5 = inlined_call_operand.vmem [shape: f32[1,32], index: 5, kind: input, shape index: {}]
  %s6 = inlined_call_operand.vmem [shape: f32[32,16], index: 6, kind: input, shape index: {}]
  %s7 = inlined_call_operand.vmem [shape: f32[1,16], index: 7, kind: input, shape index: {}]
  %s8 = inlined_call_operand.hbm [shape: f32[16,32], index: 8, kind: input, shape index: {}]
  %s9 = inlined_call_operand.vmem [shape: f32[1,32], index: 9, kind: input, shape index: {}]
  %s10 = inlined_call_operand.hbm [shape: f32[16,32], index: 10, kind: output, shape index: {}]
  %s11 = sld [smem:[#allocation0]]
  $region62: #{tpu_custom_call.1} parent=0
    _
  %s13 = ssub.s32 1, %s11
  %s14 = scalar_select 0, %s13, %s11
  $region1: #{tpu_custom_call.1} parent=0
    #allocation2 [shape = 'u8[8192]{0}', space=vmem, size = 0x2000, scoped, tag = 'input window, operand 1, single buffered']
    #allocation3 [shape = 's32[1]{0}', space=sflag, size = 0x4, scoped, tag = 'scoped memory for tpu_custom_call.1']
    #allocation4 [shape = 's32[1]{0}', space=sflag, size = 0x4, scoped, tag = 'scoped memory for tpu_custom_call.1']
    #allocation5 [shape = 'u8[16384]{0}', space=vmem, size = 0x4000, scoped, tag = 'input window, operand 4, single buffered']
    #allocation6 [shape = 's32[1]{0}', space=sflag, size = 0x4, scoped, tag = 'scoped memory for tpu_custom_call.1']
    #allocation7 [shape = 'u8[8192]{0}', space=vmem, size = 0x2000, scoped, tag = 'input window, operand 8, single buffered']
    #allocation8 [shape = 'u8[8192]{0}', space=vmem, size = 0x2000, scoped, tag = 'output window, operand 0, single buffered']
    %15 = vsyncpa [#allocation3], 0
    %16 = vsyncpa [#allocation6], 0
    %17 = vsyncpa [#allocation4], 0
    // Predicated region
    $region2: #{tpu_custom_call.1} parent=1 // pred_check
      _
    $region3: #{tpu_custom_call.1} parent=1 // pred_check_branch
      %19 = sbr.rel (0) target = $region5
    $region4: #{tpu_custom_call.1} parent=1 // pred_region
      _
    $region5: #{tpu_custom_call.1} parent=1 // pred_fallthru
      _
    // Predicated region
    $region6: #{tpu_custom_call.1} parent=1 // pred_check
      _
    $region7: #{tpu_custom_call.1} parent=1 // pred_check_branch
      %21 = sbr.rel (0) target = $region9
    $region8: #{tpu_custom_call.1} parent=1 // pred_region
      %s23 = ssub.s32 256, 256
      %24 = vsyncadd [#allocation3], %s23
      %s25 = sshll.u32 [#allocation2], 4
      %s26 = int_to_ptr.vmem [resolvable:$true] %s25
      %31 = dma.hbm_to_vmem [thread:$0]  %s1, 256, %s26, [#allocation3], 128, 128, 8
    $region9: #{tpu_custom_call.1} parent=1 // pred_fallthru
      _
    // Predicated region
    $region10: #{tpu_custom_call.1} parent=1 // pred_check
      _
    $region11: #{tpu_custom_call.1} parent=1 // pred_check_branch
      %33 = sbr.rel (0) target = $region13
    $region12: #{tpu_custom_call.1} parent=1 // pred_region
      _
    $region13: #{tpu_custom_call.1} parent=1 // pred_fallthru
      _
    // Predicated region
    $region14: #{tpu_custom_call.1} parent=1 // pred_check
      _
    $region15: #{tpu_custom_call.1} parent=1 // pred_check_branch
      %35 = sbr.rel (0) target = $region17
    $region16: #{tpu_custom_call.1} parent=1 // pred_region
      _
    $region17: #{tpu_custom_call.1} parent=1 // pred_fallthru
      _
    // Predicated region
    $region18: #{tpu_custom_call.1} parent=1 // pred_check
      _
    $region19: #{tpu_custom_call.1} parent=1 // pred_check_branch
      %37 = sbr.rel (0) target = $region21
    $region20: #{tpu_custom_call.1} parent=1 // pred_region
      %s39 = ssub.s32 512, 512
      %40 = vsyncadd [#allocation6], %s39
      %s41 = sshll.u32 [#allocation5], 4
      %s42 = int_to_ptr.vmem [resolvable:$true] %s41
      %47 = dma.hbm_to_vmem [thread:$0]  %s4, 512, %s42, [#allocation6], 128, 128, 8
    $region21: #{tpu_custom_call.1} parent=1 // pred_fallthru
      _
    // Predicated region
    $region22: #{tpu_custom_call.1} parent=1 // pred_check
      _
    $region23: #{tpu_custom_call.1} parent=1 // pred_check_branch
      %49 = sbr.rel (0) target = $region25
    $region24: #{tpu_custom_call.1} parent=1 // pred_region
      _
    $region25: #{tpu_custom_call.1} parent=1 // pred_fallthru
      _
    // Predicated region
    $region26: #{tpu_custom_call.1} parent=1 // pred_check
      _
    $region27: #{tpu_custom_call.1} parent=1 // pred_check_branch
      %51 = sbr.rel (0) target = $region29
    $region28: #{tpu_custom_call.1} parent=1 // pred_region
      _
    $region29: #{tpu_custom_call.1} parent=1 // pred_fallthru
      _
    // Predicated region
    $region30: #{tpu_custom_call.1} parent=1 // pred_check
      _
    $region31: #{tpu_custom_call.1} parent=1 // pred_check_branch
      %53 = sbr.rel (0) target = $region33
    $region32: #{tpu_custom_call.1} parent=1 // pred_region
      _
    $region33: #{tpu_custom_call.1} parent=1 // pred_fallthru
      _
    // Predicated region
    $region34: #{tpu_custom_call.1} parent=1 // pred_check
      _
    $region35: #{tpu_custom_call.1} parent=1 // pred_check_branch
      %55 = sbr.rel (0) target = $region37
    $region36: #{tpu_custom_call.1} parent=1 // pred_region
      %s57 = ssub.s32 256, 256
      %58 = vsyncadd [#allocation6], %s57
      %s59 = sshll.u32 [#allocation7], 4
      %s60 = int_to_ptr.vmem [resolvable:$true] %s59
      %65 = dma.hbm_to_vmem [thread:$0]  %s8, 256, %s60, [#allocation6], 128, 128, 8
    $region37: #{tpu_custom_call.1} parent=1 // pred_fallthru
      _
    // Predicated region
    $region38: #{tpu_custom_call.1} parent=1 // pred_check
      _
    $region39: #{tpu_custom_call.1} parent=1 // pred_check_branch
      %67 = sbr.rel (0) target = $region41
    $region40: #{tpu_custom_call.1} parent=1 // pred_region
      _
    $region41: #{tpu_custom_call.1} parent=1 // pred_fallthru
      _
    // Predicated region
    $region42: #{tpu_custom_call.1} parent=1 // pred_check
      _
    $region43: #{tpu_custom_call.1} parent=1 // pred_check_branch
      %69 = sbr.rel (0) target = $region45
    $region44: #{tpu_custom_call.1} parent=1 // pred_region
      %70 = dma.done [#allocation3], 256
    $region45: #{tpu_custom_call.1} parent=1 // pred_fallthru
      _
    // Predicated region
    $region46: #{tpu_custom_call.1} parent=1 // pred_check
      _
    $region47: #{tpu_custom_call.1} parent=1 // pred_check_branch
      %72 = sbr.rel (0) target = $region49
    $region48: #{tpu_custom_call.1} parent=1 // pred_region
      %73 = dma.done [#allocation6], 512
    $region49: #{tpu_custom_call.1} parent=1 // pred_fallthru
      _
    // Predicated region
    $region50: #{tpu_custom_call.1} parent=1 // pred_check
      _
    $region51: #{tpu_custom_call.1} parent=1 // pred_check_branch
      %75 = sbr.rel (0) target = $region53
    $region52: #{tpu_custom_call.1} parent=1 // pred_region
      %76 = dma.done [#allocation6], 256
    $region53: #{tpu_custom_call.1} parent=1 // pred_fallthru
      _
    %v77 = vld [vmem:[%s0] sm:$0xff]
    %v78 = vld [vmem:[%s0 + $0x8] sm:$0xff]
    %v79 = vld [vmem:[%s2] sm:$0xff]
    %v80 = vld [vmem:[%s2 + $0x8] sm:$0xff]
    %v81 = vld [vmem:[%s2 + $0x10] sm:$0xff]
    %v82 = vld [vmem:[%s2 + $0x18] sm:$0xff]
    %v83 = vld [vmem:[%s3] sm:$0x1]
    %v85 = vlaneseq
    %v86 = vshrl.u32 %v85, 7
    %v87 = vsub.s32 0, %v86
    %v88 = vrot.slane %v83, %v87
    %vm90 = vcmask 261120
    %v92 = vsel %vm90, %v77, 0
    %v95 = vsel %vm90, %v78, 0
    %97 = vmatprep.subr.mxu0 0.0
    %98 = vmatpush1.msra.mxu0 %v79
    %99 = vmatprep.subr.mxu0 0.0
    %100 = vmatpush1.msra.mxu0 %v80
    %101 = vmatprep.subr.mxu0 0.0
    %102 = vmatpush1.msra.mxu0 %v81
    %103 = vmatprep.subr.mxu0 0.0
    %104 = vmatpush1.msra.mxu0 %v82
    %105 = vmatprep.subr.mxu0 0.0
    %106 = vmatpush1.msra.mxu0 0.0
    %107 = vmatprep.subr.mxu0 0.0
    %108 = vmatpush1.msra.mxu0 0.0
    %109 = vmatprep.subr.mxu0 0.0
    %110 = vmatpush1.msra.mxu0 0.0
    %111 = vmatprep.subr.mxu0 0.0
    %112 = vmatpush1.msra.mxu0 0.0
    %113 = vmatprep.subr.mxu0 0.0
    %114 = vmatpush1.msra.mxu0 0.0
    %115 = vmatprep.subr.mxu0 0.0
    %116 = vmatpush1.msra.mxu0 0.0
    %117 = vmatprep.subr.mxu0 0.0
    %118 = vmatpush1.msra.mxu0 0.0
    %119 = vmatprep.subr.mxu0 0.0
    %120 = vmatpush1.msra.mxu0 0.0
    %121 = vmatprep.subr.mxu0 0.0
    %122 = vmatpush1.msra.mxu0 0.0
    %123 = vmatprep.subr.mxu0 0.0
    %124 = vmatpush1.msra.mxu0 0.0
    %125 = vmatprep.subr.mxu0 0.0
    %126 = vmatpush1.msra.mxu0 0.0
    %127 = vmatprep.subr.mxu0 0.0
    %128 = vmatpush1.msra.mxu0 0.0
    %129 = vmatprep.subr.mxu0 0.0
    %130 = vmatpush1.msra.mxu0 0.0
    %131 = vmatprep.subr.mxu0 0.0
    %132 = vmatpush1.msra.mxu0 0.0
    %133 = vmatprep.subr.mxu0 0.0
    %134 = vmatpush1.msra.mxu0 0.0
    %135 = vmatprep.subr.mxu0 0.0
    %136 = vmatpush1.msra.mxu0 0.0
    %137 = vmatprep.subr.mxu0 0.0
    %138 = vmatpush1.msra.mxu0 0.0
    %139 = vmatprep.subr.mxu0 0.0
    %140 = vmatpush1.msra.mxu0 0.0
    %141 = vmatprep.subr.mxu0 0.0
    %142 = vmatpush1.msra.mxu0 0.0
    %143 = vmatprep.subr.mxu0 0.0
    %144 = vmatpush1.msra.mxu0 0.0
    %145 = vmatprep.subr.mxu0 0.0
    %146 = vmatpush1.msra.mxu0 0.0
    %147 = vmatprep.subr.mxu0 0.0
    %148 = vmatpush1.msra.mxu0 0.0
    %149 = vmatprep.subr.mxu0 0.0
    %150 = vmatpush1.msra.mxu0 0.0
    %151 = vmatprep.subr.mxu0 0.0
    %152 = vmatpush1.msra.mxu0 0.0
    %153 = vmatprep.subr.mxu0 0.0
    %154 = vmatpush1.msra.mxu0 0.0
    %155 = vmatprep.subr.mxu0 0.0
    %156 = vmatpush1.msra.mxu0 0.0
    %157 = vmatprep.subr.mxu0 0.0
    %158 = vmatpush1.msra.mxu0 0.0
    %159 = vmatprep.subr.mxu0 0.0
    %160 = vmatpush1.msra.mxu0 0.0
    %161 = vmatprep.mubr.f32.mxu0 0.0
    %162 = vmatmul.mubr.f32.gmra.mrb[0].mxu0 %v92
    %v163 = vpop.f32.mrb[0].mxu0
    %v164 = vadd.f32 %v88, %v163
    %v165 = vpop.f32.mrb[0].mxu0
    %166 = vmatprep.mubr.f32.mxu0 0.0
    %167 = vmatmul.mubr.f32.gmra.mrb[0].mxu0 %v95
    %v168 = vpop.f32.mrb[0].mxu0
    %v169 = vadd.f32 %v88, %v168
    %v170 = vpop.f32.mrb[0].mxu0
    %171 = vdwg.mxu0
    %174 = vrot.lane.b32.xlu0 %v164, 120
    %v175 = vpop.permute.xlu0 %174
    %176 = vrot.lane.b32.xlu0 %v169, 120
    %v177 = vpop.permute.xlu0 %176
    %180 = vrot.lane.b32.xlu0 %v164, 112
    %v181 = vpop.permute.xlu0 %180
    %182 = vrot.lane.b32.xlu0 %v169, 112
    %v183 = vpop.permute.xlu0 %182
    %186 = vrot.lane.b32.xlu0 %v164, 104
    %v187 = vpop.permute.xlu0 %186
    %188 = vrot.lane.b32.xlu0 %v169, 104
    %v189 = vpop.permute.xlu0 %188
    %v192 = vmul.f32 %v164, 0.35355338
    %v193 = vmul.f32 %v169, 0.35355338
    %v194 = vmul.f32 %v175, 0.35355338
    %v195 = vmul.f32 %v177, 0.35355338
    %v196 = vmul.f32 %v181, 0.35355338
    %v197 = vmul.f32 %v183, 0.35355338
    %v198 = vmul.f32 %v187, 0.35355338
    %v199 = vmul.f32 %v189, 0.35355338
    %v200 = vld [vmem:[#allocation2] sm:$0xff]
    %v201 = vld [vmem:[#allocation2 + $0x8] sm:$0xff]
    %202 = vrot.lane.b32.xlu0 %v164, 96
    %v203 = vpop.permute.xlu0 %202
    %204 = vrot.lane.b32.xlu0 %v169, 96
    %v205 = vpop.permute.xlu0 %204
    %vm206 = vcmask 64512
    %v208 = vsel %vm206, %v192, 0
    %v211 = vsel %vm206, %v193, 0
    %v213 = vsel %vm206, %v203, 0
    %v215 = vsel %vm206, %v205, 0
    %217 = vmatprep.subr.mxu0 0.0
    %218 = vmatpush1.xpose.msra.mxu0 %v213
    %219 = vmatprep.subr.mxu0 0.0
    %220 = vmatpush1.xpose.msra.mxu0 %v215
    %221 = vmatprep.subr.mxu0 0.0
    %222 = vmatpush1.xpose.msra.mxu0 0.0
    %223 = vmatprep.subr.mxu0 0.0
    %224 = vmatpush1.xpose.msra.mxu0 0.0
    %225 = vmatprep.subr.mxu0 0.0
    %226 = vmatpush1.xpose.msra.mxu0 0.0
    %227 = vmatprep.subr.mxu0 0.0
    %228 = vmatpush1.xpose.msra.mxu0 0.0
    %229 = vmatprep.subr.mxu0 0.0
    %230 = vmatpush1.xpose.msra.mxu0 0.0
    %231 = vmatprep.subr.mxu0 0.0
    %232 = vmatpush1.xpose.msra.mxu0 0.0
    %233 = vmatprep.subr.mxu0 0.0
    %234 = vmatpush1.xpose.msra.mxu0 0.0
    %235 = vmatprep.subr.mxu0 0.0
    %236 = vmatpush1.xpose.msra.mxu0 0.0
    %237 = vmatprep.subr.mxu0 0.0
    %238 = vmatpush1.xpose.msra.mxu0 0.0
    %239 = vmatprep.subr.mxu0 0.0
    %240 = vmatpush1.xpose.msra.mxu0 0.0
    %241 = vmatprep.subr.mxu0 0.0
    %242 = vmatpush1.xpose.msra.mxu0 0.0
    %243 = vmatprep.subr.mxu0 0.0
    %244 = vmatpush1.xpose.msra.mxu0 0.0
    %245 = vmatprep.subr.mxu0 0.0
    %246 = vmatpush1.xpose.msra.mxu0 0.0
    %247 = vmatprep.subr.mxu0 0.0
    %248 = vmatpush1.xpose.msra.mxu0 0.0
    %249 = vmatprep.subr.mxu0 0.0
    %250 = vmatpush1.xpose.msra.mxu0 0.0
    %251 = vmatprep.subr.mxu0 0.0
    %252 = vmatpush1.xpose.msra.mxu0 0.0
    %253 = vmatprep.subr.mxu0 0.0
    %254 = vmatpush1.xpose.msra.mxu0 0.0
    %255 = vmatprep.subr.mxu0 0.0
    %256 = vmatpush1.xpose.msra.mxu0 0.0
    %257 = vmatprep.subr.mxu0 0.0
    %258 = vmatpush1.xpose.msra.mxu0 0.0
    %259 = vmatprep.subr.mxu0 0.0
    %260 = vmatpush1.xpose.msra.mxu0 0.0
    %261 = vmatprep.subr.mxu0 0.0
    %262 = vmatpush1.xpose.msra.mxu0 0.0
    %263 = vmatprep.subr.mxu0 0.0
    %264 = vmatpush1.xpose.msra.mxu0 0.0
    %265 = vmatprep.subr.mxu0 0.0
    %266 = vmatpush1.xpose.msra.mxu0 0.0
    %267 = vmatprep.subr.mxu0 0.0
    %268 = vmatpush1.xpose.msra.mxu0 0.0
    %269 = vmatprep.subr.mxu0 0.0
    %270 = vmatpush1.xpose.msra.mxu0 0.0
    %271 = vmatprep.subr.mxu0 0.0
    %272 = vmatpush1.xpose.msra.mxu0 0.0
    %273 = vmatprep.subr.mxu0 0.0
    %274 = vmatpush1.xpose.msra.mxu0 0.0
    %275 = vmatprep.subr.mxu0 0.0
    %276 = vmatpush1.xpose.msra.mxu0 0.0
    %277 = vmatprep.subr.mxu0 0.0
    %278 = vmatpush1.xpose.msra.mxu0 0.0
    %279 = vmatprep.subr.mxu0 0.0
    %280 = vmatpush1.xpose.msra.mxu0 0.0
    %281 = vmatprep.mubr.f32.mxu0 0.0
    %282 = vmatmul.mubr.f32.gmra.mrb[0].mxu0 %v208
    %v283 = vpop.f32.mrb[0].mxu0
    %v284 = vadd.f32 %v200, %v283
    %v285 = vpop.f32.mrb[0].mxu0
    %286 = vmatprep.mubr.f32.mxu0 0.0
    %287 = vmatmul.mubr.f32.gmra.mrb[0].mxu0 %v211
    %v288 = vpop.f32.mrb[0].mxu0
    %v289 = vadd.f32 %v201, %v288
    %v290 = vpop.f32.mrb[0].mxu0
    %291 = vdwg.mxu0
    %292 = vrot.lane.b32.xlu0 %v175, 96
    %v293 = vpop.permute.xlu0 %292
    %294 = vrot.lane.b32.xlu0 %v177, 96
    %v295 = vpop.permute.xlu0 %294
    %v297 = vsel %vm206, %v194, 0
    %v300 = vsel %vm206, %v195, 0
    %v302 = vsel %vm206, %v293, 0
    %v304 = vsel %vm206, %v295, 0
    %306 = vmatprep.subr.mxu0 0.0
    %307 = vmatpush1.xpose.msra.mxu0 %v302
    %308 = vmatprep.subr.mxu0 0.0
    %309 = vmatpush1.xpose.msra.mxu0 %v304
    %310 = vmatprep.subr.mxu0 0.0
    %311 = vmatpush1.xpose.msra.mxu0 0.0
    %312 = vmatprep.subr.mxu0 0.0
    %313 = vmatpush1.xpose.msra.mxu0 0.0
    %314 = vmatprep.subr.mxu0 0.0
    %315 = vmatpush1.xpose.msra.mxu0 0.0
    %316 = vmatprep.subr.mxu0 0.0
    %317 = vmatpush1.xpose.msra.mxu0 0.0
    %318 = vmatprep.subr.mxu0 0.0
    %319 = vmatpush1.xpose.msra.mxu0 0.0
    %320 = vmatprep.subr.mxu0 0.0
    %321 = vmatpush1.xpose.msra.mxu0 0.0
    %322 = vmatprep.subr.mxu0 0.0
    %323 = vmatpush1.xpose.msra.mxu0 0.0
    %324 = vmatprep.subr.mxu0 0.0
    %325 = vmatpush1.xpose.msra.mxu0 0.0
    %326 = vmatprep.subr.mxu0 0.0
    %327 = vmatpush1.xpose.msra.mxu0 0.0
    %328 = vmatprep.subr.mxu0 0.0
    %329 = vmatpush1.xpose.msra.mxu0 0.0
    %330 = vmatprep.subr.mxu0 0.0
    %331 = vmatpush1.xpose.msra.mxu0 0.0
    %332 = vmatprep.subr.mxu0 0.0
    %333 = vmatpush1.xpose.msra.mxu0 0.0
    %334 = vmatprep.subr.mxu0 0.0
    %335 = vmatpush1.xpose.msra.mxu0 0.0
    %336 = vmatprep.subr.mxu0 0.0
    %337 = vmatpush1.xpose.msra.mxu0 0.0
    %338 = vmatprep.subr.mxu0 0.0
    %339 = vmatpush1.xpose.msra.mxu0 0.0
    %340 = vmatprep.subr.mxu0 0.0
    %341 = vmatpush1.xpose.msra.mxu0 0.0
    %342 = vmatprep.subr.mxu0 0.0
    %343 = vmatpush1.xpose.msra.mxu0 0.0
    %344 = vmatprep.subr.mxu0 0.0
    %345 = vmatpush1.xpose.msra.mxu0 0.0
    %346 = vmatprep.subr.mxu0 0.0
    %347 = vmatpush1.xpose.msra.mxu0 0.0
    %348 = vmatprep.subr.mxu0 0.0
    %349 = vmatpush1.xpose.msra.mxu0 0.0
    %350 = vmatprep.subr.mxu0 0.0
    %351 = vmatpush1.xpose.msra.mxu0 0.0
    %352 = vmatprep.subr.mxu0 0.0
    %353 = vmatpush1.xpose.msra.mxu0 0.0
    %354 = vmatprep.subr.mxu0 0.0
    %355 = vmatpush1.xpose.msra.mxu0 0.0
    %356 = vmatprep.subr.mxu0 0.0
    %357 = vmatpush1.xpose.msra.mxu0 0.0
    %358 = vmatprep.subr.mxu0 0.0
    %359 = vmatpush1.xpose.msra.mxu0 0.0
    %360 = vmatprep.subr.mxu0 0.0
    %361 = vmatpush1.xpose.msra.mxu0 0.0
    %362 = vmatprep.subr.mxu0 0.0
    %363 = vmatpush1.xpose.msra.mxu0 0.0
    %364 = vmatprep.subr.mxu0 0.0
    %365 = vmatpush1.xpose.msra.mxu0 0.0
    %366 = vmatprep.subr.mxu0 0.0
    %367 = vmatpush1.xpose.msra.mxu0 0.0
    %368 = vmatprep.subr.mxu0 0.0
    %369 = vmatpush1.xpose.msra.mxu0 0.0
    %370 = vmatprep.mubr.f32.mxu0 0.0
    %371 = vmatmul.mubr.f32.gmra.mrb[0].mxu0 %v297
    %v372 = vpop.f32.mrb[0].mxu0
    %v373 = vadd.f32 %v200, %v372
    %v374 = vpop.f32.mrb[0].mxu0
    %375 = vmatprep.mubr.f32.mxu0 0.0
    %376 = vmatmul.mubr.f32.gmra.mrb[0].mxu0 %v300
    %v377 = vpop.f32.mrb[0].mxu0
    %v378 = vadd.f32 %v201, %v377
    %v379 = vpop.f32.mrb[0].mxu0
    %380 = vdwg.mxu0
    %381 = vrot.lane.b32.xlu0 %v181, 96
    %v382 = vpop.permute.xlu0 %381
    %383 = vrot.lane.b32.xlu0 %v183, 96
    %v384 = vpop.permute.xlu0 %383
    %v386 = vsel %vm206, %v196, 0
    %v389 = vsel %vm206, %v197, 0
    %v391 = vsel %vm206, %v382, 0
    %v393 = vsel %vm206, %v384, 0
    %395 = vmatprep.subr.mxu0 0.0
    %396 = vmatpush1.xpose.msra.mxu0 %v391
    %397 = vmatprep.subr.mxu0 0.0
    %398 = vmatpush1.xpose.msra.mxu0 %v393
    %399 = vmatprep.subr.mxu0 0.0
    %400 = vmatpush1.xpose.msra.mxu0 0.0
    %401 = vmatprep.subr.mxu0 0.0
    %402 = vmatpush1.xpose.msra.mxu0 0.0
    %403 = vmatprep.subr.mxu0 0.0
    %404 = vmatpush1.xpose.msra.mxu0 0.0
    %405 = vmatprep.subr.mxu0 0.0
    %406 = vmatpush1.xpose.msra.mxu0 0.0
    %407 = vmatprep.subr.mxu0 0.0
    %408 = vmatpush1.xpose.msra.mxu0 0.0
    %409 = vmatprep.subr.mxu0 0.0
    %410 = vmatpush1.xpose.msra.mxu0 0.0
    %411 = vmatprep.subr.mxu0 0.0
    %412 = vmatpush1.xpose.msra.mxu0 0.0
    %413 = vmatprep.subr.mxu0 0.0
    %414 = vmatpush1.xpose.msra.mxu0 0.0
    %415 = vmatprep.subr.mxu0 0.0
    %416 = vmatpush1.xpose.msra.mxu0 0.0
    %417 = vmatprep.subr.mxu0 0.0
    %418 = vmatpush1.xpose.msra.mxu0 0.0
    %419 = vmatprep.subr.mxu0 0.0
    %420 = vmatpush1.xpose.msra.mxu0 0.0
    %421 = vmatprep.subr.mxu0 0.0
    %422 = vmatpush1.xpose.msra.mxu0 0.0
    %423 = vmatprep.subr.mxu0 0.0
    %424 = vmatpush1.xpose.msra.mxu0 0.0
    %425 = vmatprep.subr.mxu0 0.0
    %426 = vmatpush1.xpose.msra.mxu0 0.0
    %427 = vmatprep.subr.mxu0 0.0
    %428 = vmatpush1.xpose.msra.mxu0 0.0
    %429 = vmatprep.subr.mxu0 0.0
    %430 = vmatpush1.xpose.msra.mxu0 0.0
    %431 = vmatprep.subr.mxu0 0.0
    %432 = vmatpush1.xpose.msra.mxu0 0.0
    %433 = vmatprep.subr.mxu0 0.0
    %434 = vmatpush1.xpose.msra.mxu0 0.0
    %435 = vmatprep.subr.mxu0 0.0
    %436 = vmatpush1.xpose.msra.mxu0 0.0
    %437 = vmatprep.subr.mxu0 0.0
    %438 = vmatpush1.xpose.msra.mxu0 0.0
    %439 = vmatprep.subr.mxu0 0.0
    %440 = vmatpush1.xpose.msra.mxu0 0.0
    %441 = vmatprep.subr.mxu0 0.0
    %442 = vmatpush1.xpose.msra.mxu0 0.0
    %443 = vmatprep.subr.mxu0 0.0
    %444 = vmatpush1.xpose.msra.mxu0 0.0
    %445 = vmatprep.subr.mxu0 0.0
    %446 = vmatpush1.xpose.msra.mxu0 0.0
    %447 = vmatprep.subr.mxu0 0.0
    %448 = vmatpush1.xpose.msra.mxu0 0.0
    %449 = vmatprep.subr.mxu0 0.0
    %450 = vmatpush1.xpose.msra.mxu0 0.0
    %451 = vmatprep.subr.mxu0 0.0
    %452 = vmatpush1.xpose.msra.mxu0 0.0
    %453 = vmatprep.subr.mxu0 0.0
    %454 = vmatpush1.xpose.msra.mxu0 0.0
    %455 = vmatprep.subr.mxu0 0.0
    %456 = vmatpush1.xpose.msra.mxu0 0.0
    %457 = vmatprep.subr.mxu0 0.0
    %458 = vmatpush1.xpose.msra.mxu0 0.0
    %459 = vmatprep.mubr.f32.mxu0 0.0
    %460 = vmatmul.mubr.f32.gmra.mrb[0].mxu0 %v386
    %v461 = vpop.f32.mrb[0].mxu0
    %v462 = vadd.f32 %v200, %v461
    %v463 = vpop.f32.mrb[0].mxu0
    %464 = vmatprep.mubr.f32.mxu0 0.0
    %465 = vmatmul.mubr.f32.gmra.mrb[0].mxu0 %v389
    %v466 = vpop.f32.mrb[0].mxu0
    %v467 = vadd.f32 %v201, %v466
    %v468 = vpop.f32.mrb[0].mxu0
    %469 = vdwg.mxu0
    %470 = vrot.lane.b32.xlu0 %v187, 96
    %v471 = vpop.permute.xlu0 %470
    %472 = vrot.lane.b32.xlu0 %v189, 96
    %v473 = vpop.permute.xlu0 %472
    %v475 = vsel %vm206, %v198, 0
    %v478 = vsel %vm206, %v199, 0
    %v480 = vsel %vm206, %v471, 0
    %v482 = vsel %vm206, %v473, 0
    %484 = vmatprep.subr.mxu0 0.0
    %485 = vmatpush1.xpose.msra.mxu0 %v480
    %486 = vmatprep.subr.mxu0 0.0
    %487 = vmatpush1.xpose.msra.mxu0 %v482
    %488 = vmatprep.subr.mxu0 0.0
    %489 = vmatpush1.xpose.msra.mxu0 0.0
    %490 = vmatprep.subr.mxu0 0.0
    %491 = vmatpush1.xpose.msra.mxu0 0.0
    %492 = vmatprep.subr.mxu0 0.0
    %493 = vmatpush1.xpose.msra.mxu0 0.0
    %494 = vmatprep.subr.mxu0 0.0
    %495 = vmatpush1.xpose.msra.mxu0 0.0
    %496 = vmatprep.subr.mxu0 0.0
    %497 = vmatpush1.xpose.msra.mxu0 0.0
    %498 = vmatprep.subr.mxu0 0.0
    %499 = vmatpush1.xpose.msra.mxu0 0.0
    %500 = vmatprep.subr.mxu0 0.0
    %501 = vmatpush1.xpose.msra.mxu0 0.0
    %502 = vmatprep.subr.mxu0 0.0
    %503 = vmatpush1.xpose.msra.mxu0 0.0
    %504 = vmatprep.subr.mxu0 0.0
    %505 = vmatpush1.xpose.msra.mxu0 0.0
    %506 = vmatprep.subr.mxu0 0.0
    %507 = vmatpush1.xpose.msra.mxu0 0.0
    %508 = vmatprep.subr.mxu0 0.0
    %509 = vmatpush1.xpose.msra.mxu0 0.0
    %510 = vmatprep.subr.mxu0 0.0
    %511 = vmatpush1.xpose.msra.mxu0 0.0
    %512 = vmatprep.subr.mxu0 0.0
    %513 = vmatpush1.xpose.msra.mxu0 0.0
    %514 = vmatprep.subr.mxu0 0.0
    %515 = vmatpush1.xpose.msra.mxu0 0.0
    %516 = vmatprep.subr.mxu0 0.0
    %517 = vmatpush1.xpose.msra.mxu0 0.0
    %518 = vmatprep.subr.mxu0 0.0
    %519 = vmatpush1.xpose.msra.mxu0 0.0
    %520 = vmatprep.subr.mxu0 0.0
    %521 = vmatpush1.xpose.msra.mxu0 0.0
    %522 = vmatprep.subr.mxu0 0.0
    %523 = vmatpush1.xpose.msra.mxu0 0.0
    %524 = vmatprep.subr.mxu0 0.0
    %525 = vmatpush1.xpose.msra.mxu0 0.0
    %526 = vmatprep.subr.mxu0 0.0
    %527 = vmatpush1.xpose.msra.mxu0 0.0
    %528 = vmatprep.subr.mxu0 0.0
    %529 = vmatpush1.xpose.msra.mxu0 0.0
    %530 = vmatprep.subr.mxu0 0.0
    %531 = vmatpush1.xpose.msra.mxu0 0.0
    %532 = vmatprep.subr.mxu0 0.0
    %533 = vmatpush1.xpose.msra.mxu0 0.0
    %534 = vmatprep.subr.mxu0 0.0
    %535 = vmatpush1.xpose.msra.mxu0 0.0
    %536 = vmatprep.subr.mxu0 0.0
    %537 = vmatpush1.xpose.msra.mxu0 0.0
    %538 = vmatprep.subr.mxu0 0.0
    %539 = vmatpush1.xpose.msra.mxu0 0.0
    %540 = vmatprep.subr.mxu0 0.0
    %541 = vmatpush1.xpose.msra.mxu0 0.0
    %542 = vmatprep.subr.mxu0 0.0
    %543 = vmatpush1.xpose.msra.mxu0 0.0
    %544 = vmatprep.subr.mxu0 0.0
    %545 = vmatpush1.xpose.msra.mxu0 0.0
    %546 = vmatprep.subr.mxu0 0.0
    %547 = vmatpush1.xpose.msra.mxu0 0.0
    %548 = vmatprep.mubr.f32.mxu0 0.0
    %549 = vmatmul.mubr.f32.gmra.mrb[0].mxu0 %v475
    %v550 = vpop.f32.mrb[0].mxu0
    %v551 = vadd.f32 %v200, %v550
    %v552 = vpop.f32.mrb[0].mxu0
    %553 = vmatprep.mubr.f32.mxu0 0.0
    %554 = vmatmul.mubr.f32.gmra.mrb[0].mxu0 %v478
    %v555 = vpop.f32.mrb[0].mxu0
    %v556 = vadd.f32 %v201, %v555
    %v557 = vpop.f32.mrb[0].mxu0
    %558 = vdwg.mxu0
    %vm559 = vcmask 130048
    %v560 = vsel %vm559, %v284, -inf
    %561 = vmax.xlane.f32.xlu0 %v560
    %v562 = vpop.xlane.xlu0 %561
    %v563 = vsel %vm559, %v289, -inf
    %564 = vmax.xlane.f32.xlu0 %v563
    %v565 = vpop.xlane.xlu0 %564
    %v566 = vsel %vm559, %v373, -inf
    %567 = vmax.xlane.f32.xlu0 %v566
    %v568 = vpop.xlane.xlu0 %567
    %v569 = vsel %vm559, %v378, -inf
    %570 = vmax.xlane.f32.xlu0 %v569
    %v571 = vpop.xlane.xlu0 %570
    %v572 = vsel %vm559, %v462, -inf
    %573 = vmax.xlane.f32.xlu0 %v572
    %v574 = vpop.xlane.xlu0 %573
    %v575 = vsel %vm559, %v467, -inf
    %576 = vmax.xlane.f32.xlu0 %v575
    %v577 = vpop.xlane.xlu0 %576
    %v578 = vsel %vm559, %v551, -inf
    %579 = vmax.xlane.f32.xlu0 %v578
    %v580 = vpop.xlane.xlu0 %579
    %v581 = vsel %vm559, %v556, -inf
    %582 = vmax.xlane.f32.xlu0 %v581
    %v583 = vpop.xlane.xlu0 %582
    %v584 = vsub.f32 %v284, %v562
    %v585 = vsub.f32 %v289, %v565
    %v586 = vsub.f32 %v373, %v568
    %v587 = vsub.f32 %v378, %v571
    %v588 = vsub.f32 %v462, %v574
    %v589 = vsub.f32 %v467, %v577
    %v590 = vsub.f32 %v551, %v580
    %v591 = vsub.f32 %v556, %v583
    %v592 = vmul.f32 %v584, 1.442695
    %v593 = vpow.pop %v592
    %v594 = vmul.f32 %v585, 1.442695
    %v595 = vpow.pop %v594
    %v596 = vmul.f32 %v586, 1.442695
    %v597 = vpow.pop %v596
    %v598 = vmul.f32 %v587, 1.442695
    %v599 = vpow.pop %v598
    %v600 = vmul.f32 %v588, 1.442695
    %v601 = vpow.pop %v600
    %v602 = vmul.f32 %v589, 1.442695
    %v603 = vpow.pop %v602
    %v604 = vmul.f32 %v590, 1.442695
    %v605 = vpow.pop %v604
    %v606 = vmul.f32 %v591, 1.442695
    %v607 = vpow.pop %v606
    %v608 = vsel %vm559, %v593, 0.0
    %609 = vadd.xlane.f32.xlu0 %v608
    %v610 = vpop.xlane.xlu0 %609
    %v611 = vsel %vm559, %v595, 0.0
    %612 = vadd.xlane.f32.xlu0 %v611
    %v613 = vpop.xlane.xlu0 %612
    %v614 = vsel %vm559, %v597, 0.0
    %615 = vadd.xlane.f32.xlu0 %v614
    %v616 = vpop.xlane.xlu0 %615
    %v617 = vsel %vm559, %v599, 0.0
    %618 = vadd.xlane.f32.xlu0 %v617
    %v619 = vpop.xlane.xlu0 %618
    %v620 = vsel %vm559, %v601, 0.0
    %621 = vadd.xlane.f32.xlu0 %v620
    %v622 = vpop.xlane.xlu0 %621
    %v623 = vsel %vm559, %v603, 0.0
    %624 = vadd.xlane.f32.xlu0 %v623
    %v625 = vpop.xlane.xlu0 %624
    %v626 = vsel %vm559, %v605, 0.0
    %627 = vadd.xlane.f32.xlu0 %v626
    %v628 = vpop.xlane.xlu0 %627
    %v629 = vsel %vm559, %v607, 0.0
    %630 = vadd.xlane.f32.xlu0 %v629
    %v631 = vpop.xlane.xlu0 %630
    %v632 = vrcp.pop %v610
    %v633 = vrcp.pop %v613
    %v634 = vrcp.pop %v616
    %v635 = vrcp.pop %v619
    %v636 = vrcp.pop %v622
    %v637 = vrcp.pop %v625
    %v638 = vrcp.pop %v628
    %v639 = vrcp.pop %v631
    %v640 = vmul.f32 %v593, %v632
    %v641 = vmul.f32 %v595, %v633
    %v642 = vmul.f32 %v597, %v634
    %v643 = vmul.f32 %v599, %v635
    %v644 = vmul.f32 %v601, %v636
    %v645 = vmul.f32 %v603, %v637
    %v646 = vmul.f32 %v605, %v638
    %v647 = vmul.f32 %v607, %v639
    %648 = vrot.lane.b32.xlu0 %v164, 64
    %v649 = vpop.permute.xlu0 %648
    %650 = vrot.lane.b32.xlu0 %v169, 64
    %v651 = vpop.permute.xlu0 %650
    %v655 = vsel %vm559, %v640, 0
    %v658 = vsel %vm559, %v641, 0
    %660 = vmatprep.subr.mxu0 0.0
    %661 = vmatpush1.msra.mxu0 %v649
    %662 = vmatprep.subr.mxu0 0.0
    %663 = vmatpush1.msra.mxu0 %v651
    %664 = vmatprep.subr.mxu0 0.0
    %665 = vmatpush1.msra.mxu0 0.0
    %666 = vmatprep.subr.mxu0 0.0
    %667 = vmatpush1.msra.mxu0 0.0
    %668 = vmatprep.subr.mxu0 0.0
    %669 = vmatpush1.msra.mxu0 0.0
    %670 = vmatprep.subr.mxu0 0.0
    %671 = vmatpush1.msra.mxu0 0.0
    %672 = vmatprep.subr.mxu0 0.0
    %673 = vmatpush1.msra.mxu0 0.0
    %674 = vmatprep.subr.mxu0 0.0
    %675 = vmatpush1.msra.mxu0 0.0
    %676 = vmatprep.subr.mxu0 0.0
    %677 = vmatpush1.msra.mxu0 0.0
    %678 = vmatprep.subr.mxu0 0.0
    %679 = vmatpush1.msra.mxu0 0.0
    %680 = vmatprep.subr.mxu0 0.0
    %681 = vmatpush1.msra.mxu0 0.0
    %682 = vmatprep.subr.mxu0 0.0
    %683 = vmatpush1.msra.mxu0 0.0
    %684 = vmatprep.subr.mxu0 0.0
    %685 = vmatpush1.msra.mxu0 0.0
    %686 = vmatprep.subr.mxu0 0.0
    %687 = vmatpush1.msra.mxu0 0.0
    %688 = vmatprep.subr.mxu0 0.0
    %689 = vmatpush1.msra.mxu0 0.0
    %690 = vmatprep.subr.mxu0 0.0
    %691 = vmatpush1.msra.mxu0 0.0
    %692 = vmatprep.subr.mxu0 0.0
    %693 = vmatpush1.msra.mxu0 0.0
    %694 = vmatprep.subr.mxu0 0.0
    %695 = vmatpush1.msra.mxu0 0.0
    %696 = vmatprep.subr.mxu0 0.0
    %697 = vmatpush1.msra.mxu0 0.0
    %698 = vmatprep.subr.mxu0 0.0
    %699 = vmatpush1.msra.mxu0 0.0
    %700 = vmatprep.subr.mxu0 0.0
    %701 = vmatpush1.msra.mxu0 0.0
    %702 = vmatprep.subr.mxu0 0.0
    %703 = vmatpush1.msra.mxu0 0.0
    %704 = vmatprep.subr.mxu0 0.0
    %705 = vmatpush1.msra.mxu0 0.0
    %706 = vmatprep.subr.mxu0 0.0
    %707 = vmatpush1.msra.mxu0 0.0
    %708 = vmatprep.subr.mxu0 0.0
    %709 = vmatpush1.msra.mxu0 0.0
    %710 = vmatprep.subr.mxu0 0.0
    %711 = vmatpush1.msra.mxu0 0.0
    %712 = vmatprep.subr.mxu0 0.0
    %713 = vmatpush1.msra.mxu0 0.0
    %714 = vmatprep.subr.mxu0 0.0
    %715 = vmatpush1.msra.mxu0 0.0
    %716 = vmatprep.subr.mxu0 0.0
    %717 = vmatpush1.msra.mxu0 0.0
    %718 = vmatprep.subr.mxu0 0.0
    %719 = vmatpush1.msra.mxu0 0.0
    %720 = vmatprep.subr.mxu0 0.0
    %721 = vmatpush1.msra.mxu0 0.0
    %722 = vmatprep.subr.mxu0 0.0
    %723 = vmatpush1.msra.mxu0 0.0
    %724 = vmatprep.mubr.f32.mxu0 0.0
    %725 = vmatmul.mubr.f32.gmra.mrb[0].mxu0 %v655
    %v726 = vpop.f32.mrb[0].mxu0
    %v727 = vadd.f32 0.0, %v726
    %v728 = vpop.f32.mrb[0].mxu0
    %729 = vmatprep.mubr.f32.mxu0 0.0
    %730 = vmatmul.mubr.f32.gmra.mrb[0].mxu0 %v658
    %v731 = vpop.f32.mrb[0].mxu0
    %v732 = vadd.f32 0.0, %v731
    %v733 = vpop.f32.mrb[0].mxu0
    %734 = vdwg.mxu0
    %735 = vrot.lane.b32.xlu0 %v175, 64
    %v736 = vpop.permute.xlu0 %735
    %737 = vrot.lane.b32.xlu0 %v177, 64
    %v738 = vpop.permute.xlu0 %737
    %v742 = vsel %vm559, %v642, 0
    %v745 = vsel %vm559, %v643, 0
    %747 = vmatprep.subr.mxu0 0.0
    %748 = vmatpush1.msra.mxu0 %v736
    %749 = vmatprep.subr.mxu0 0.0
    %750 = vmatpush1.msra.mxu0 %v738
    %751 = vmatprep.subr.mxu0 0.0
    %752 = vmatpush1.msra.mxu0 0.0
    %753 = vmatprep.subr.mxu0 0.0
    %754 = vmatpush1.msra.mxu0 0.0
    %755 = vmatprep.subr.mxu0 0.0
    %756 = vmatpush1.msra.mxu0 0.0
    %757 = vmatprep.subr.mxu0 0.0
    %758 = vmatpush1.msra.mxu0 0.0
    %759 = vmatprep.subr.mxu0 0.0
    %760 = vmatpush1.msra.mxu0 0.0
    %761 = vmatprep.subr.mxu0 0.0
    %762 = vmatpush1.msra.mxu0 0.0
    %763 = vmatprep.subr.mxu0 0.0
    %764 = vmatpush1.msra.mxu0 0.0
    %765 = vmatprep.subr.mxu0 0.0
    %766 = vmatpush1.msra.mxu0 0.0
    %767 = vmatprep.subr.mxu0 0.0
    %768 = vmatpush1.msra.mxu0 0.0
    %769 = vmatprep.subr.mxu0 0.0
    %770 = vmatpush1.msra.mxu0 0.0
    %771 = vmatprep.subr.mxu0 0.0
    %772 = vmatpush1.msra.mxu0 0.0
    %773 = vmatprep.subr.mxu0 0.0
    %774 = vmatpush1.msra.mxu0 0.0
    %775 = vmatprep.subr.mxu0 0.0
    %776 = vmatpush1.msra.mxu0 0.0
    %777 = vmatprep.subr.mxu0 0.0
    %778 = vmatpush1.msra.mxu0 0.0
    %779 = vmatprep.subr.mxu0 0.0
    %780 = vmatpush1.msra.mxu0 0.0
    %781 = vmatprep.subr.mxu0 0.0
    %782 = vmatpush1.msra.mxu0 0.0
    %783 = vmatprep.subr.mxu0 0.0
    %784 = vmatpush1.msra.mxu0 0.0
    %785 = vmatprep.subr.mxu0 0.0
    %786 = vmatpush1.msra.mxu0 0.0
    %787 = vmatprep.subr.mxu0 0.0
    %788 = vmatpush1.msra.mxu0 0.0
    %789 = vmatprep.subr.mxu0 0.0
    %790 = vmatpush1.msra.mxu0 0.0
    %791 = vmatprep.subr.mxu0 0.0
    %792 = vmatpush1.msra.mxu0 0.0
    %793 = vmatprep.subr.mxu0 0.0
    %794 = vmatpush1.msra.mxu0 0.0
    %795 = vmatprep.subr.mxu0 0.0
    %796 = vmatpush1.msra.mxu0 0.0
    %797 = vmatprep.subr.mxu0 0.0
    %798 = vmatpush1.msra.mxu0 0.0
    %799 = vmatprep.subr.mxu0 0.0
    %800 = vmatpush1.msra.mxu0 0.0
    %801 = vmatprep.subr.mxu0 0.0
    %802 = vmatpush1.msra.mxu0 0.0
    %803 = vmatprep.subr.mxu0 0.0
    %804 = vmatpush1.msra.mxu0 0.0
    %805 = vmatprep.subr.mxu0 0.0
    %806 = vmatpush1.msra.mxu0 0.0
    %807 = vmatprep.subr.mxu0 0.0
    %808 = vmatpush1.msra.mxu0 0.0
    %809 = vmatprep.subr.mxu0 0.0
    %810 = vmatpush1.msra.mxu0 0.0
    %811 = vmatprep.mubr.f32.mxu0 0.0
    %812 = vmatmul.mubr.f32.gmra.mrb[0].mxu0 %v742
    %v813 = vpop.f32.mrb[0].mxu0
    %v814 = vadd.f32 0.0, %v813
    %v815 = vpop.f32.mrb[0].mxu0
    %816 = vmatprep.mubr.f32.mxu0 0.0
    %817 = vmatmul.mubr.f32.gmra.mrb[0].mxu0 %v745
    %v818 = vpop.f32.mrb[0].mxu0
    %v819 = vadd.f32 0.0, %v818
    %v820 = vpop.f32.mrb[0].mxu0
    %821 = vdwg.mxu0
    %822 = vrot.lane.b32.xlu0 %v181, 64
    %v823 = vpop.permute.xlu0 %822
    %824 = vrot.lane.b32.xlu0 %v183, 64
    %v825 = vpop.permute.xlu0 %824
    %v829 = vsel %vm559, %v644, 0
    %v832 = vsel %vm559, %v645, 0
    %834 = vmatprep.subr.mxu0 0.0
    %835 = vmatpush1.msra.mxu0 %v823
    %836 = vmatprep.subr.mxu0 0.0
    %837 = vmatpush1.msra.mxu0 %v825
    %838 = vmatprep.subr.mxu0 0.0
    %839 = vmatpush1.msra.mxu0 0.0
    %840 = vmatprep.subr.mxu0 0.0
    %841 = vmatpush1.msra.mxu0 0.0
    %842 = vmatprep.subr.mxu0 0.0
    %843 = vmatpush1.msra.mxu0 0.0
    %844 = vmatprep.subr.mxu0 0.0
    %845 = vmatpush1.msra.mxu0 0.0
    %846 = vmatprep.subr.mxu0 0.0
    %847 = vmatpush1.msra.mxu0 0.0
    %848 = vmatprep.subr.mxu0 0.0
    %849 = vmatpush1.msra.mxu0 0.0
    %850 = vmatprep.subr.mxu0 0.0
    %851 = vmatpush1.msra.mxu0 0.0
    %852 = vmatprep.subr.mxu0 0.0
    %853 = vmatpush1.msra.mxu0 0.0
    %854 = vmatprep.subr.mxu0 0.0
    %855 = vmatpush1.msra.mxu0 0.0
    %856 = vmatprep.subr.mxu0 0.0
    %857 = vmatpush1.msra.mxu0 0.0
    %858 = vmatprep.subr.mxu0 0.0
    %859 = vmatpush1.msra.mxu0 0.0
    %860 = vmatprep.subr.mxu0 0.0
    %861 = vmatpush1.msra.mxu0 0.0
    %862 = vmatprep.subr.mxu0 0.0
    %863 = vmatpush1.msra.mxu0 0.0
    %864 = vmatprep.subr.mxu0 0.0
    %865 = vmatpush1.msra.mxu0 0.0
    %866 = vmatprep.subr.mxu0 0.0
    %867 = vmatpush1.msra.mxu0 0.0
    %868 = vmatprep.subr.mxu0 0.0
    %869 = vmatpush1.msra.mxu0 0.0
    %870 = vmatprep.subr.mxu0 0.0
    %871 = vmatpush1.msra.mxu0 0.0
    %872 = vmatprep.subr.mxu0 0.0
    %873 = vmatpush1.msra.mxu0 0.0
    %874 = vmatprep.subr.mxu0 0.0
    %875 = vmatpush1.msra.mxu0 0.0
    %876 = vmatprep.subr.mxu0 0.0
    %877 = vmatpush1.msra.mxu0 0.0
    %878 = vmatprep.subr.mxu0 0.0
    %879 = vmatpush1.msra.mxu0 0.0
    %880 = vmatprep.subr.mxu0 0.0
    %881 = vmatpush1.msra.mxu0 0.0
    %882 = vmatprep.subr.mxu0 0.0
    %883 = vmatpush1.msra.mxu0 0.0
    %884 = vmatprep.subr.mxu0 0.0
    %885 = vmatpush1.msra.mxu0 0.0
    %886 = vmatprep.subr.mxu0 0.0
    %887 = vmatpush1.msra.mxu0 0.0
    %888 = vmatprep.subr.mxu0 0.0
    %889 = vmatpush1.msra.mxu0 0.0
    %890 = vmatprep.subr.mxu0 0.0
    %891 = vmatpush1.msra.mxu0 0.0
    %892 = vmatprep.subr.mxu0 0.0
    %893 = vmatpush1.msra.mxu0 0.0
    %894 = vmatprep.subr.mxu0 0.0
    %895 = vmatpush1.msra.mxu0 0.0
    %896 = vmatprep.subr.mxu0 0.0
    %897 = vmatpush1.msra.mxu0 0.0
    %898 = vmatprep.mubr.f32.mxu0 0.0
    %899 = vmatmul.mubr.f32.gmra.mrb[0].mxu0 %v829
    %v900 = vpop.f32.mrb[0].mxu0
    %v901 = vadd.f32 0.0, %v900
    %v902 = vpop.f32.mrb[0].mxu0
    %903 = vmatprep.mubr.f32.mxu0 0.0
    %904 = vmatmul.mubr.f32.gmra.mrb[0].mxu0 %v832
    %v905 = vpop.f32.mrb[0].mxu0
    %v906 = vadd.f32 0.0, %v905
    %v907 = vpop.f32.mrb[0].mxu0
    %908 = vdwg.mxu0
    %909 = vrot.lane.b32.xlu0 %v187, 64
    %v910 = vpop.permute.xlu0 %909
    %911 = vrot.lane.b32.xlu0 %v189, 64
    %v912 = vpop.permute.xlu0 %911
    %v916 = vsel %vm559, %v646, 0
    %v919 = vsel %vm559, %v647, 0
    %921 = vmatprep.subr.mxu0 0.0
    %922 = vmatpush1.msra.mxu0 %v910
    %923 = vmatprep.subr.mxu0 0.0
    %924 = vmatpush1.msra.mxu0 %v912
    %925 = vmatprep.subr.mxu0 0.0
    %926 = vmatpush1.msra.mxu0 0.0
    %927 = vmatprep.subr.mxu0 0.0
    %928 = vmatpush1.msra.mxu0 0.0
    %929 = vmatprep.subr.mxu0 0.0
    %930 = vmatpush1.msra.mxu0 0.0
    %931 = vmatprep.subr.mxu0 0.0
    %932 = vmatpush1.msra.mxu0 0.0
    %933 = vmatprep.subr.mxu0 0.0
    %934 = vmatpush1.msra.mxu0 0.0
    %935 = vmatprep.subr.mxu0 0.0
    %936 = vmatpush1.msra.mxu0 0.0
    %937 = vmatprep.subr.mxu0 0.0
    %938 = vmatpush1.msra.mxu0 0.0
    %939 = vmatprep.subr.mxu0 0.0
    %940 = vmatpush1.msra.mxu0 0.0
    %941 = vmatprep.subr.mxu0 0.0
    %942 = vmatpush1.msra.mxu0 0.0
    %943 = vmatprep.subr.mxu0 0.0
    %944 = vmatpush1.msra.mxu0 0.0
    %945 = vmatprep.subr.mxu0 0.0
    %946 = vmatpush1.msra.mxu0 0.0
    %947 = vmatprep.subr.mxu0 0.0
    %948 = vmatpush1.msra.mxu0 0.0
    %949 = vmatprep.subr.mxu0 0.0
    %950 = vmatpush1.msra.mxu0 0.0
    %951 = vmatprep.subr.mxu0 0.0
    %952 = vmatpush1.msra.mxu0 0.0
    %953 = vmatprep.subr.mxu0 0.0
    %954 = vmatpush1.msra.mxu0 0.0
    %955 = vmatprep.subr.mxu0 0.0
    %956 = vmatpush1.msra.mxu0 0.0
    %957 = vmatprep.subr.mxu0 0.0
    %958 = vmatpush1.msra.mxu0 0.0
    %959 = vmatprep.subr.mxu0 0.0
    %960 = vmatpush1.msra.mxu0 0.0
    %961 = vmatprep.subr.mxu0 0.0
    %962 = vmatpush1.msra.mxu0 0.0
    %963 = vmatprep.subr.mxu0 0.0
    %964 = vmatpush1.msra.mxu0 0.0
    %965 = vmatprep.subr.mxu0 0.0
    %966 = vmatpush1.msra.mxu0 0.0
    %967 = vmatprep.subr.mxu0 0.0
    %968 = vmatpush1.msra.mxu0 0.0
    %969 = vmatprep.subr.mxu0 0.0
    %970 = vmatpush1.msra.mxu0 0.0
    %971 = vmatprep.subr.mxu0 0.0
    %972 = vmatpush1.msra.mxu0 0.0
    %973 = vmatprep.subr.mxu0 0.0
    %974 = vmatpush1.msra.mxu0 0.0
    %975 = vmatprep.subr.mxu0 0.0
    %976 = vmatpush1.msra.mxu0 0.0
    %977 = vmatprep.subr.mxu0 0.0
    %978 = vmatpush1.msra.mxu0 0.0
    %979 = vmatprep.subr.mxu0 0.0
    %980 = vmatpush1.msra.mxu0 0.0
    %981 = vmatprep.subr.mxu0 0.0
    %982 = vmatpush1.msra.mxu0 0.0
    %983 = vmatprep.subr.mxu0 0.0
    %984 = vmatpush1.msra.mxu0 0.0
    %985 = vmatprep.mubr.f32.mxu0 0.0
    %986 = vmatmul.mubr.f32.gmra.mrb[0].mxu0 %v916
    %v987 = vpop.f32.mrb[0].mxu0
    %v988 = vadd.f32 0.0, %v987
    %v989 = vpop.f32.mrb[0].mxu0
    %990 = vmatprep.mubr.f32.mxu0 0.0
    %991 = vmatmul.mubr.f32.gmra.mrb[0].mxu0 %v919
    %v992 = vpop.f32.mrb[0].mxu0
    %v993 = vadd.f32 0.0, %v992
    %v994 = vpop.f32.mrb[0].mxu0
    %995 = vdwg.mxu0
    %998 = vrot.lane.b32.xlu0 %v814, 8
    %v999 = vpop.permute.xlu0 %998
    %1000 = vrot.lane.b32.xlu0 %v819, 8
    %v1001 = vpop.permute.xlu0 %1000
    %1006 = vrot.lane.b32.xlu0 %v901, 16
    %v1007 = vpop.permute.xlu0 %1006
    %1008 = vrot.lane.b32.xlu0 %v906, 16
    %v1009 = vpop.permute.xlu0 %1008
    %1014 = vrot.lane.b32.xlu0 %v988, 24
    %v1015 = vpop.permute.xlu0 %1014
    %1016 = vrot.lane.b32.xlu0 %v993, 24
    %v1017 = vpop.permute.xlu0 %1016
    %v1020 = vsel %vm206, %v727, %v999
    %v1021 = vsel %vm206, %v732, %v1001
    %v1022 = vsel %vm559, %v1020, %v1007
    %v1023 = vsel %vm559, %v1021, %v1009
    %vm1024 = vcmask 195584
    %v1025 = vsel %vm1024, %v1022, %v1015
    %v1026 = vsel %vm1024, %v1023, %v1017
    %v1027 = vld [vmem:[#allocation5] sm:$0xff]
    %v1028 = vld [vmem:[#allocation5 + $0x8] sm:$0xff]
    %v1029 = vld [vmem:[#allocation5 + $0x10] sm:$0xff]
    %v1030 = vld [vmem:[#allocation5 + $0x18] sm:$0xff]
    %v1031 = vld [vmem:[%s5] sm:$0x1]
    %v1033 = vlaneseq
    %v1034 = vshrl.u32 %v1033, 7
    %v1035 = vsub.s32 0, %v1034
    %v1036 = vrot.slane %v1031, %v1035
    %v1039 = vsel %vm90, %v1025, 0
    %v1042 = vsel %vm90, %v1026, 0
    %1044 = vmatprep.subr.mxu0 0.0
    %1045 = vmatpush1.msra.mxu0 %v1027
    %1046 = vmatprep.subr.mxu0 0.0
    %1047 = vmatpush1.msra.mxu0 %v1028
    %1048 = vmatprep.subr.mxu0 0.0
    %1049 = vmatpush1.msra.mxu0 %v1029
    %1050 = vmatprep.subr.mxu0 0.0
    %1051 = vmatpush1.msra.mxu0 %v1030
    %1052 = vmatprep.subr.mxu0 0.0
    %1053 = vmatpush1.msra.mxu0 0.0
    %1054 = vmatprep.subr.mxu0 0.0
    %1055 = vmatpush1.msra.mxu0 0.0
    %1056 = vmatprep.subr.mxu0 0.0
    %1057 = vmatpush1.msra.mxu0 0.0
    %1058 = vmatprep.subr.mxu0 0.0
    %1059 = vmatpush1.msra.mxu0 0.0
    %1060 = vmatprep.subr.mxu0 0.0
    %1061 = vmatpush1.msra.mxu0 0.0
    %1062 = vmatprep.subr.mxu0 0.0
    %1063 = vmatpush1.msra.mxu0 0.0
    %1064 = vmatprep.subr.mxu0 0.0
    %1065 = vmatpush1.msra.mxu0 0.0
    %1066 = vmatprep.subr.mxu0 0.0
    %1067 = vmatpush1.msra.mxu0 0.0
    %1068 = vmatprep.subr.mxu0 0.0
    %1069 = vmatpush1.msra.mxu0 0.0
    %1070 = vmatprep.subr.mxu0 0.0
    %1071 = vmatpush1.msra.mxu0 0.0
    %1072 = vmatprep.subr.mxu0 0.0
    %1073 = vmatpush1.msra.mxu0 0.0
    %1074 = vmatprep.subr.mxu0 0.0
    %1075 = vmatpush1.msra.mxu0 0.0
    %1076 = vmatprep.subr.mxu0 0.0
    %1077 = vmatpush1.msra.mxu0 0.0
    %1078 = vmatprep.subr.mxu0 0.0
    %1079 = vmatpush1.msra.mxu0 0.0
    %1080 = vmatprep.subr.mxu0 0.0
    %1081 = vmatpush1.msra.mxu0 0.0
    %1082 = vmatprep.subr.mxu0 0.0
    %1083 = vmatpush1.msra.mxu0 0.0
    %1084 = vmatprep.subr.mxu0 0.0
    %1085 = vmatpush1.msra.mxu0 0.0
    %1086 = vmatprep.subr.mxu0 0.0
    %1087 = vmatpush1.msra.mxu0 0.0
    %1088 = vmatprep.subr.mxu0 0.0
    %1089 = vmatpush1.msra.mxu0 0.0
    %1090 = vmatprep.subr.mxu0 0.0
    %1091 = vmatpush1.msra.mxu0 0.0
    %1092 = vmatprep.subr.mxu0 0.0
    %1093 = vmatpush1.msra.mxu0 0.0
    %1094 = vmatprep.subr.mxu0 0.0
    %1095 = vmatpush1.msra.mxu0 0.0
    %1096 = vmatprep.subr.mxu0 0.0
    %1097 = vmatpush1.msra.mxu0 0.0
    %1098 = vmatprep.subr.mxu0 0.0
    %1099 = vmatpush1.msra.mxu0 0.0
    %1100 = vmatprep.subr.mxu0 0.0
    %1101 = vmatpush1.msra.mxu0 0.0
    %1102 = vmatprep.subr.mxu0 0.0
    %1103 = vmatpush1.msra.mxu0 0.0
    %1104 = vmatprep.subr.mxu0 0.0
    %1105 = vmatpush1.msra.mxu0 0.0
    %1106 = vmatprep.subr.mxu0 0.0
    %1107 = vmatpush1.msra.mxu0 0.0
    %1108 = vmatprep.mubr.f32.mxu0 0.0
    %1109 = vmatmul.mubr.f32.gmra.mrb[0].mxu0 %v1039
    %v1110 = vpop.f32.mrb[0].mxu0
    %v1111 = vadd.f32 %v1036, %v1110
    %v1112 = vpop.f32.mrb[0].mxu0
    %1113 = vmatprep.mubr.f32.mxu0 0.0
    %1114 = vmatmul.mubr.f32.gmra.mrb[0].mxu0 %v1042
    %v1115 = vpop.f32.mrb[0].mxu0
    %v1116 = vadd.f32 %v1036, %v1115
    %v1117 = vpop.f32.mrb[0].mxu0
    %1118 = vdwg.mxu0
    %v1119 = vadd.f32 %v77, %v1111
    %v1120 = vadd.f32 %v78, %v1116
    %v1121 = vld [vmem:[%s6] sm:$0xff]
    %v1122 = vld [vmem:[%s6 + $0x8] sm:$0xff]
    %v1123 = vld [vmem:[%s6 + $0x10] sm:$0xff]
    %v1124 = vld [vmem:[%s6 + $0x18] sm:$0xff]
    %v1125 = vld [vmem:[%s7] sm:$0x1]
    %v1127 = vlaneseq
    %v1128 = vshrl.u32 %v1127, 7
    %v1129 = vsub.s32 0, %v1128
    %v1130 = vrot.slane %v1125, %v1129
    %v1133 = vsel %vm90, %v1119, 0
    %v1136 = vsel %vm90, %v1120, 0
    %1138 = vmatprep.subr.mxu0 0.0
    %1139 = vmatpush1.msra.mxu0 %v1121
    %1140 = vmatprep.subr.mxu0 0.0
    %1141 = vmatpush1.msra.mxu0 %v1122
    %1142 = vmatprep.subr.mxu0 0.0
    %1143 = vmatpush1.msra.mxu0 %v1123
    %1144 = vmatprep.subr.mxu0 0.0
    %1145 = vmatpush1.msra.mxu0 %v1124
    %1146 = vmatprep.subr.mxu0 0.0
    %1147 = vmatpush1.msra.mxu0 0.0
    %1148 = vmatprep.subr.mxu0 0.0
    %1149 = vmatpush1.msra.mxu0 0.0
    %1150 = vmatprep.subr.mxu0 0.0
    %1151 = vmatpush1.msra.mxu0 0.0
    %1152 = vmatprep.subr.mxu0 0.0
    %1153 = vmatpush1.msra.mxu0 0.0
    %1154 = vmatprep.subr.mxu0 0.0
    %1155 = vmatpush1.msra.mxu0 0.0
    %1156 = vmatprep.subr.mxu0 0.0
    %1157 = vmatpush1.msra.mxu0 0.0
    %1158 = vmatprep.subr.mxu0 0.0
    %1159 = vmatpush1.msra.mxu0 0.0
    %1160 = vmatprep.subr.mxu0 0.0
    %1161 = vmatpush1.msra.mxu0 0.0
    %1162 = vmatprep.subr.mxu0 0.0
    %1163 = vmatpush1.msra.mxu0 0.0
    %1164 = vmatprep.subr.mxu0 0.0
    %1165 = vmatpush1.msra.mxu0 0.0
    %1166 = vmatprep.subr.mxu0 0.0
    %1167 = vmatpush1.msra.mxu0 0.0
    %1168 = vmatprep.subr.mxu0 0.0
    %1169 = vmatpush1.msra.mxu0 0.0
    %1170 = vmatprep.subr.mxu0 0.0
    %1171 = vmatpush1.msra.mxu0 0.0
    %1172 = vmatprep.subr.mxu0 0.0
    %1173 = vmatpush1.msra.mxu0 0.0
    %1174 = vmatprep.subr.mxu0 0.0
    %1175 = vmatpush1.msra.mxu0 0.0
    %1176 = vmatprep.subr.mxu0 0.0
    %1177 = vmatpush1.msra.mxu0 0.0
    %1178 = vmatprep.subr.mxu0 0.0
    %1179 = vmatpush1.msra.mxu0 0.0
    %1180 = vmatprep.subr.mxu0 0.0
    %1181 = vmatpush1.msra.mxu0 0.0
    %1182 = vmatprep.subr.mxu0 0.0
    %1183 = vmatpush1.msra.mxu0 0.0
    %1184 = vmatprep.subr.mxu0 0.0
    %1185 = vmatpush1.msra.mxu0 0.0
    %1186 = vmatprep.subr.mxu0 0.0
    %1187 = vmatpush1.msra.mxu0 0.0
    %1188 = vmatprep.subr.mxu0 0.0
    %1189 = vmatpush1.msra.mxu0 0.0
    %1190 = vmatprep.subr.mxu0 0.0
    %1191 = vmatpush1.msra.mxu0 0.0
    %1192 = vmatprep.subr.mxu0 0.0
    %1193 = vmatpush1.msra.mxu0 0.0
    %1194 = vmatprep.subr.mxu0 0.0
    %1195 = vmatpush1.msra.mxu0 0.0
    %1196 = vmatprep.subr.mxu0 0.0
    %1197 = vmatpush1.msra.mxu0 0.0
    %1198 = vmatprep.subr.mxu0 0.0
    %1199 = vmatpush1.msra.mxu0 0.0
    %1200 = vmatprep.subr.mxu0 0.0
    %1201 = vmatpush1.msra.mxu0 0.0
    %1202 = vmatprep.mubr.f32.mxu0 0.0
    %1203 = vmatmul.mubr.f32.gmra.mrb[0].mxu0 %v1133
    %v1204 = vpop.f32.mrb[0].mxu0
    %v1205 = vadd.f32 %v1130, %v1204
    %v1206 = vpop.f32.mrb[0].mxu0
    %1207 = vmatprep.mubr.f32.mxu0 0.0
    %1208 = vmatmul.mubr.f32.gmra.mrb[0].mxu0 %v1136
    %v1209 = vpop.f32.mrb[0].mxu0
    %v1210 = vadd.f32 %v1130, %v1209
    %v1211 = vpop.f32.mrb[0].mxu0
    %1212 = vdwg.mxu0
    %vm1213 = vcmp.ge.f32.partialorder %v1205, 0.0
    %vm1214 = vcmp.ge.f32.partialorder %v1210, 0.0
    %v1215 = vmul.f32 %v1205, 0.01
    %v1216 = vmul.f32 %v1210, 0.01
    %v1217 = vsel %vm1213, %v1205, %v1215
    %v1218 = vsel %vm1214, %v1210, %v1216
    %v1219 = vld [vmem:[#allocation7] sm:$0xff]
    %v1220 = vld [vmem:[#allocation7 + $0x8] sm:$0xff]
    %v1221 = vld [vmem:[%s9] sm:$0x1]
    %v1223 = vlaneseq
    %v1224 = vshrl.u32 %v1223, 7
    %v1225 = vsub.s32 0, %v1224
    %v1226 = vrot.slane %v1221, %v1225
    %v1229 = vsel %vm559, %v1217, 0
    %v1232 = vsel %vm559, %v1218, 0
    %1234 = vmatprep.subr.mxu0 0.0
    %1235 = vmatpush1.msra.mxu0 %v1219
    %1236 = vmatprep.subr.mxu0 0.0
    %1237 = vmatpush1.msra.mxu0 %v1220
    %1238 = vmatprep.subr.mxu0 0.0
    %1239 = vmatpush1.msra.mxu0 0.0
    %1240 = vmatprep.subr.mxu0 0.0
    %1241 = vmatpush1.msra.mxu0 0.0
    %1242 = vmatprep.subr.mxu0 0.0
    %1243 = vmatpush1.msra.mxu0 0.0
    %1244 = vmatprep.subr.mxu0 0.0
    %1245 = vmatpush1.msra.mxu0 0.0
    %1246 = vmatprep.subr.mxu0 0.0
    %1247 = vmatpush1.msra.mxu0 0.0
    %1248 = vmatprep.subr.mxu0 0.0
    %1249 = vmatpush1.msra.mxu0 0.0
    %1250 = vmatprep.subr.mxu0 0.0
    %1251 = vmatpush1.msra.mxu0 0.0
    %1252 = vmatprep.subr.mxu0 0.0
    %1253 = vmatpush1.msra.mxu0 0.0
    %1254 = vmatprep.subr.mxu0 0.0
    %1255 = vmatpush1.msra.mxu0 0.0
    %1256 = vmatprep.subr.mxu0 0.0
    %1257 = vmatpush1.msra.mxu0 0.0
    %1258 = vmatprep.subr.mxu0 0.0
    %1259 = vmatpush1.msra.mxu0 0.0
    %1260 = vmatprep.subr.mxu0 0.0
    %1261 = vmatpush1.msra.mxu0 0.0
    %1262 = vmatprep.subr.mxu0 0.0
    %1263 = vmatpush1.msra.mxu0 0.0
    %1264 = vmatprep.subr.mxu0 0.0
    %1265 = vmatpush1.msra.mxu0 0.0
    %1266 = vmatprep.subr.mxu0 0.0
    %1267 = vmatpush1.msra.mxu0 0.0
    %1268 = vmatprep.subr.mxu0 0.0
    %1269 = vmatpush1.msra.mxu0 0.0
    %1270 = vmatprep.subr.mxu0 0.0
    %1271 = vmatpush1.msra.mxu0 0.0
    %1272 = vmatprep.subr.mxu0 0.0
    %1273 = vmatpush1.msra.mxu0 0.0
    %1274 = vmatprep.subr.mxu0 0.0
    %1275 = vmatpush1.msra.mxu0 0.0
    %1276 = vmatprep.subr.mxu0 0.0
    %1277 = vmatpush1.msra.mxu0 0.0
    %1278 = vmatprep.subr.mxu0 0.0
    %1279 = vmatpush1.msra.mxu0 0.0
    %1280 = vmatprep.subr.mxu0 0.0
    %1281 = vmatpush1.msra.mxu0 0.0
    %1282 = vmatprep.subr.mxu0 0.0
    %1283 = vmatpush1.msra.mxu0 0.0
    %1284 = vmatprep.subr.mxu0 0.0
    %1285 = vmatpush1.msra.mxu0 0.0
    %1286 = vmatprep.subr.mxu0 0.0
    %1287 = vmatpush1.msra.mxu0 0.0
    %1288 = vmatprep.subr.mxu0 0.0
    %1289 = vmatpush1.msra.mxu0 0.0
    %1290 = vmatprep.subr.mxu0 0.0
    %1291 = vmatpush1.msra.mxu0 0.0
    %1292 = vmatprep.subr.mxu0 0.0
    %1293 = vmatpush1.msra.mxu0 0.0
    %1294 = vmatprep.subr.mxu0 0.0
    %1295 = vmatpush1.msra.mxu0 0.0
    %1296 = vmatprep.subr.mxu0 0.0
    %1297 = vmatpush1.msra.mxu0 0.0
    %1298 = vmatprep.mubr.f32.mxu0 0.0
    %1299 = vmatmul.mubr.f32.gmra.mrb[0].mxu0 %v1229
    %v1300 = vpop.f32.mrb[0].mxu0
    %v1301 = vadd.f32 %v1226, %v1300
    %v1302 = vpop.f32.mrb[0].mxu0
    %1303 = vmatprep.mubr.f32.mxu0 0.0
    %1304 = vmatmul.mubr.f32.gmra.mrb[0].mxu0 %v1232
    %v1305 = vpop.f32.mrb[0].mxu0
    %v1306 = vadd.f32 %v1226, %v1305
    %v1307 = vpop.f32.mrb[0].mxu0
    %1308 = vdwg.mxu0
    %v1309 = vadd.f32 %v1119, %v1301
    %v1310 = vadd.f32 %v1120, %v1306
    %1311 = vst.msk [vmem:[#allocation8] sm:$0xff] %vm90, %v1309
    %1312 = vst.msk [vmem:[#allocation8 + $0x8] sm:$0xff] %vm90, %v1310
    // Predicated region
    $region54: #{tpu_custom_call.1} parent=1 // pred_check
      _
    $region55: #{tpu_custom_call.1} parent=1 // pred_check_branch
      %1314 = sbr.rel (0) target = $region57
    $region56: #{tpu_custom_call.1} parent=1 // pred_region
      %s1316 = ssub.s32 256, 256
      %1317 = vsyncadd [#allocation4], %s1316
      %s1318 = sshll.u32 [#allocation8], 4
      %s1319 = int_to_ptr.vmem [resolvable:$true] %s1318
      %1324 = dma.vmem_to_hbm [thread:$0]  %s1319, 256, %s10, [#allocation4], 128, 128, 8
    $region57: #{tpu_custom_call.1} parent=1 // pred_fallthru
      _
    // Predicated region
    $region58: #{tpu_custom_call.1} parent=1 // pred_check
      _
    $region59: #{tpu_custom_call.1} parent=1 // pred_check_branch
      %1326 = sbr.rel (0) target = $region61
    $region60: #{tpu_custom_call.1} parent=1 // pred_region
      %1327 = dma.done [#allocation4], 256
    $region61: #{tpu_custom_call.1} parent=1 // pred_fallthru
      _
    %1328 = vsyncpa [#allocation3], 1
    %1329 = vsyncpa [#allocation6], 1
    %1330 = vsyncpa [#allocation4], 1

</llo_original>
